<compile_context>
chip_gen: v5e
topology: v5e:2x2
jax: 0.10.0
libtpu: 0.0.40
codegen_flags: <defaults>
</compile_context>

<pallas_src>
import functools

import jax
import jax.numpy as jnp
import numpy as np
from jax import lax
from jax.experimental import pallas as pl
from jax.experimental.pallas import tpu as pltpu


# ---------------------------------------------------------------------------
# Generation-aware VMEM sizing.
# ---------------------------------------------------------------------------
def _vmem_caps():
    cap = 64 * 1024 * 1024  # conservative fallback == v7x per-TC physical VMEM
    try:
        cap = int(pltpu.get_tpu_info().vmem_capacity_bytes)
    except Exception:
        pass
    budget = max(12 << 20, int(cap * 0.35))                  # ~22 MiB v7x, ~45 MiB v5e/v6e
    limit = max(32 << 20, min(int(cap * 0.625), 100 << 20))  # 40 MiB v7x, 80 MiB v5e/v6e
    return budget, limit


def _pick_hw_tile(hw_valid, taps_cin, cout, cd_bytes, budget):
    """Largest 128-multiple spatial tile whose double-buffered working set fits."""
    hw_cap = max(128, -(-hw_valid // 128) * 128)
    for cand in (8192, 4096, 2048, 1024, 512, 256, 128):
        if cand > hw_cap:
            continue
        need = (2 * taps_cin * cand * cd_bytes      # double-buffered patch block
                + 2 * cout * cand * cd_bytes        # double-buffered bf16 y block
                + cout * cand * 4                   # f32 accumulator
                + (2 << 20))                        # weights / scratch / slack
        if need <= budget:
            return cand
    return 128


# ---------------------------------------------------------------------------
# Pass 1: grouped conv (per-tap matmul sum) + streaming BN statistics.
# ---------------------------------------------------------------------------
def _conv_stats_kernel(p_ref, w_ref, y_ref, mean_ref, rstd_ref,
                       mean_sc, m2_sc, tmean_sc, tm2_sc,
                       *, t_hw, hw_valid, n_hw, n_batches, eps, has_pad):
    b = pl.program_id(0)
    j = pl.program_id(1)

    num_taps, cout, _ = w_ref.shape
    # Grouped conv as a sum of per-tap (Cout, Cin)@(Cin, t_hw) matmuls; bf16 operands,
    # f32 MXU accumulation.
    # TODO(synk): for groups>1 and large channel counts, loop per group to avoid the
    # groups-times redundant FLOPs of the zero-padded dense per-tap weight.
    acc = jnp.zeros((cout, t_hw), jnp.float32)
    for t in range(num_taps):
        acc = acc + jnp.dot(w_ref[t], p_ref[t], preferred_element_type=jnp.float32)

    # bf16 intermediate (halves the y round-trip); statistics use the f32 value.
    y_ref[...] = acc.astype(y_ref.dtype)

    # ---- per-tile statistics (masking only on the last, partial spatial tile) ----
    def _full_tile():
        m_ = jnp.sum(acc, axis=1, keepdims=True) * (1.0 / t_hw)
        d = acc - m_
        tmean_sc[...] = m_
        tm2_sc[...] = jnp.sum(d * d, axis=1, keepdims=True)

    if has_pad:
        last_valid = hw_valid - (n_hw - 1) * t_hw   # static, in (0, t_hw)

        def _partial_tile():
            col = lax.broadcasted_iota(jnp.int32, acc.shape, 1)
            msk = (col < last_valid).astype(jnp.float32)
            m_ = jnp.sum(acc * msk, axis=1, keepdims=True) * (1.0 / last_valid)
            d = (acc - m_) * msk
            tmean_sc[...] = m_
            tm2_sc[...] = jnp.sum(d * d, axis=1, keepdims=True)

        pl.when(j < n_hw - 1)(_full_tile)
        pl.when(j == n_hw - 1)(_partial_tile)
        n_t = jnp.where(j == n_hw - 1, float(last_valid), float(t_hw))
    else:
        _full_tile()
        n_t = jnp.float32(t_hw)

    # ---- Chan streaming merge (sequential "arbitrary" grid, j fastest) -----------
    # TODO(synk): splitting pass 1 across v7x's 2 TensorCores requires combining
    # per-core partial (mean, M2) explicitly; kept single-core sequential for now.
    step = b * n_hw + j

    @pl.when(step == 0)
    def _():
        mean_sc[...] = tmean_sc[...]
        m2_sc[...] = tm2_sc[...]

    @pl.when(step > 0)
    def _():
        n_prev = b * float(hw_valid) + j * float(t_hw)   # all previous tiles counted
        tot = n_prev + n_t
        delta = tmean_sc[...] - mean_sc[...]
        mean_sc[...] = mean_sc[...] + delta * (n_t / tot)
        m2_sc[...] = m2_sc[...] + tm2_sc[...] + delta * delta * (n_prev * n_t / tot)

    @pl.when(step == n_batches * n_hw - 1)
    def _():
        m_total = float(n_batches * hw_valid)
        mean_ref[...] = mean_sc[...]
        rstd_ref[...] = lax.rsqrt(m2_sc[...] * (1.0 / m_total) + eps)


# ---------------------------------------------------------------------------
# Pass 2: apply BatchNorm (training stats) + ReLU; lane-dense (B, Cout, HW) output.
# ---------------------------------------------------------------------------
def _bn_relu_kernel(y_ref, mean_ref, rstd_ref, o_ref):
    y = y_ref[...].astype(jnp.float32)
    o_ref[...] = jnp.maximum((y - mean_ref[...]) * rstd_ref[...], 0.0).astype(o_ref.dtype)


def basic_layer_forward(x_nchw, weight, *, stride=1, padding=1, dilation=1,
                        groups=1, shuffle=False, eps=1e-5,
                        compute_dtype=jnp.bfloat16):
    """Forward pass of BasicLayer. x_nchw: (B, Cin, H, W), weight: (Cout, Cin//G, KH, KW)."""
    B, Cin, H, W = x_nchw.shape
    Cout, cin_g, KH, KW = weight.shape
    assert Cin % groups == 0 and Cout % groups == 0 and cin_g == Cin // groups
    cout_g = Cout // groups
    Ho = (H + 2 * padding - dilation * (KH - 1) - 1) // stride + 1
    Wo = (W + 2 * padding - dilation * (KW - 1) - 1) // stride + 1
    HW = Ho * Wo
    T = KH * KW

    cd_bytes = jnp.dtype(compute_dtype).itemsize
    out_bytes = jnp.dtype(x_nchw.dtype).itemsize
    budget, vmem_limit = _vmem_caps()
    t_hw = _pick_hw_tile(HW, T * Cin, Cout, cd_bytes, budget)
    n_hw = -(-HW // t_hw)
    HWp = n_hw * t_hw
    has_pad = HWp != HW

    # ---- patches in a (T, B, Cin, HWp) bf16 layout: no NHWC transpose and no
    # post-stack transpose of the KH*KW-times data. ------------------------------
    # TODO(synk): fully fuse the tap extraction into pass 1 (manual DMA of padded
    # spatial slabs per tile) so the KH*KW-times patch tensor never hits HBM.
    xp = jnp.pad(x_nchw.astype(compute_dtype),
                 ((0, 0), (0, 0), (padding, padding), (padding, padding)))
    taps = []
    for kh in range(KH):
        for kw in range(KW):
            h0, w0 = kh * dilation, kw * dilation
            sl = xp[:, :, h0:h0 + (Ho - 1) * stride + 1:stride,
                          w0:w0 + (Wo - 1) * stride + 1:stride]        # (B, Cin, Ho, Wo)
            sl = sl.reshape(B, Cin, HW)
            if has_pad:
                sl = jnp.pad(sl, ((0, 0), (0, 0), (0, HWp - HW)))
            taps.append(sl)
    patches = jnp.stack(taps, axis=0)                                  # (T, B, Cin, HWp)

    # ---- per-tap weights (T, Cout, Cin); groups as zero blocks, channel shuffle
    # folded in as an output-row permutation (BN is per-channel, stats follow). ---
    wr = weight.astype(jnp.float32).reshape(Cout, cin_g, T)
    wt = jnp.zeros((T, Cout, Cin), dtype=jnp.float32)
    for g in range(groups):
        blk = jnp.transpose(wr[g * cout_g:(g + 1) * cout_g], (2, 0, 1))  # (T, cout_g, cin_g)
        wt = wt.at[:, g * cout_g:(g + 1) * cout_g, g * cin_g:(g + 1) * cin_g].set(blk)
    if shuffle and groups > 1:
        perm = np.array([(c % groups) * cout_g + (c // groups) for c in range(Cout)])
        wt = wt[:, perm, :]
    wt = wt.astype(compute_dtype)

    # ---- pass 1: conv tiles + streaming BN statistics --------------------------
    flops1 = 2 * B * HWp * T * Cin * Cout + 8 * B * HWp * Cout
    bytes1 = (T * B * Cin * HWp * cd_bytes + T * Cout * Cin * cd_bytes
              + B * Cout * HWp * cd_bytes + 2 * Cout * 4)
    y_hbm, mean, rstd = pl.pallas_call(
        functools.partial(_conv_stats_kernel, t_hw=t_hw, hw_valid=HW, n_hw=n_hw,
                          n_batches=B, eps=float(eps), has_pad=has_pad),
        out_shape=(jax.ShapeDtypeStruct((B, Cout, HWp), compute_dtype),
                   jax.ShapeDtypeStruct((Cout, 1), jnp.float32),
                   jax.ShapeDtypeStruct((Cout, 1), jnp.float32)),
        grid_spec=pltpu.PrefetchScalarGridSpec(
            num_scalar_prefetch=0,
            grid=(B, n_hw),
            in_specs=[pl.BlockSpec((T, None, Cin, t_hw), lambda b, j: (0, b, 0, j)),
                      pl.BlockSpec((T, Cout, Cin), lambda b, j: (0, 0, 0))],
            out_specs=(pl.BlockSpec((None, Cout, t_hw), lambda b, j: (b, 0, j)),
                       pl.BlockSpec((Cout, 1), lambda b, j: (0, 0)),
                       pl.BlockSpec((Cout, 1), lambda b, j: (0, 0))),
            scratch_shapes=[pltpu.VMEM((Cout, 1), jnp.float32)] * 4),
        compiler_params=pltpu.CompilerParams(
            dimension_semantics=("arbitrary", "arbitrary"),
            vmem_limit_bytes=vmem_limit),
        cost_estimate=pl.CostEstimate(flops=int(flops1), transcendentals=int(Cout),
                                      bytes_accessed=int(bytes1)),
    )(patches, wt)

    # ---- pass 2: apply BN + ReLU, larger streaming tiles, fully parallel --------
    t_hw2 = t_hw
    for k in (32, 16, 8, 4, 2, 1):
        cand = t_hw * k
        if HWp % cand != 0:
            continue
        if 2 * Cout * cand * (cd_bytes + out_bytes) + (1 << 20) <= budget:
            t_hw2 = cand
            break
    n_hw2 = HWp // t_hw2

    flops2 = 3 * B * HWp * Cout
    bytes2 = B * Cout * HWp * (cd_bytes + out_bytes) + 2 * Cout * 4
    out3 = pl.pallas_call(
        _bn_relu_kernel,
        out_shape=jax.ShapeDtypeStruct((B, Cout, HWp), x_nchw.dtype),
        grid_spec=pltpu.PrefetchScalarGridSpec(
            num_scalar_prefetch=0,
            grid=(B, n_hw2),
            in_specs=[pl.BlockSpec((None, Cout, t_hw2), lambda b, j: (b, 0, j)),
                      pl.BlockSpec((Cout, 1), lambda b, j: (0, 0)),
                      pl.BlockSpec((Cout, 1), lambda b, j: (0, 0))],
            out_specs=pl.BlockSpec((None, Cout, t_hw2), lambda b, j: (b, 0, j))),
        compiler_params=pltpu.CompilerParams(
            dimension_semantics=("parallel", "parallel"),
            vmem_limit_bytes=vmem_limit),
        cost_estimate=pl.CostEstimate(flops=int(flops2), transcendentals=0,
                                      bytes_accessed=int(bytes2)),
    )(y_hbm, mean, rstd)

    if has_pad:
        out3 = out3[:, :, :HW]
    return out3.reshape(B, Cout, Ho, Wo)                               # NCHW, no transpose


def _reference(x, w, *, stride, padding, dilation, groups, shuffle, eps,
               compute_dtype=jnp.bfloat16):
    """Pure-JAX reference matching PyTorch BasicLayer.forward (training-mode BN),
    mirroring the kernel's bf16 operand rounding and bf16 intermediate storage."""
    xr = x.astype(compute_dtype).astype(jnp.float32)
    wr = w.astype(compute_dtype).astype(jnp.float32)
    y = lax.conv_general_dilated(
        xr, wr, window_strides=(stride, stride),
        padding=((padding, padding), (padding, padding)),
        rhs_dilation=(dilation, dilation),
        dimension_numbers=('NCHW', 'OIHW', 'NCHW'),
        feature_group_count=groups)
    mean = jnp.mean(y, axis=(0, 2, 3), keepdims=True)
    var = jnp.mean((y - mean) ** 2, axis=(0, 2, 3), keepdims=True)
    yq = y.astype(compute_dtype).astype(jnp.float32)   # mirrors bf16 intermediate
    out = jnp.maximum((yq - mean) / jnp.sqrt(var + eps), 0.0)
    if shuffle and groups > 1:
        B, C, H, W = out.shape
        out = out.reshape(B, groups, C // groups, H, W)
        out = jnp.transpose(out, (0, 2, 1, 3, 4)).reshape(B, C, H, W)
    return out


if __name__ == "__main__":
    key = jax.random.PRNGKey(0)
    kx, kw = jax.random.split(key)

    # BasicLayer(in_channels=4, out_channels=8, kernel_size=3, stride=1,
    #            padding=1, dilation=1, bias=False, groups=2, shuffle=True)
    B, Cin, H, W = 2, 4, 16, 16
    Cout, ksz, groups, shuffle = 8, 3, 2, True

    x = jax.random.normal(kx, (B, Cin, H, W), dtype=jnp.float32)
    fan_in = (Cin // groups) * ksz * ksz
    weight = jax.random.normal(kw, (Cout, Cin // groups, ksz, ksz),
                               dtype=jnp.float32) / np.sqrt(fan_in)

    out = basic_layer_forward(x, weight, stride=1, padding=1, dilation=1,
                              groups=groups, shuffle=shuffle)
    out = jax.block_until_ready(out)

    ref = _reference(x, weight, stride=1, padding=1, dilation=1,
                     groups=groups, shuffle=shuffle, eps=1e-5,
                     compute_dtype=jnp.bfloat16)
    assert out.shape == (B, Cout, H, W)
    np.testing.assert_allclose(np.asarray(out), np.asarray(ref),
                               rtol=3e-3, atol=3e-3)
    print("KERNEL_OK")
</pallas_src>

<mosaic_0001>
module attributes {stable_mosaic.version = 11 : i64} {
  func.func @_conv_stats_kernel(%arg0: i32, %arg1: i32, %arg2: memref<9x1x4x256xbf16, #tpu.memory_space<vmem>>, %arg3: memref<9x8x4xbf16, #tpu.memory_space<vmem>>, %arg4: memref<1x8x256xbf16, #tpu.memory_space<vmem>>, %arg5: memref<8x1xf32, #tpu.memory_space<vmem>>, %arg6: memref<8x1xf32, #tpu.memory_space<vmem>>, %arg7: memref<8x1xf32, #tpu.memory_space<vmem>>, %arg8: memref<8x1xf32, #tpu.memory_space<vmem>>, %arg9: memref<8x1xf32, #tpu.memory_space<vmem>>, %arg10: memref<8x1xf32, #tpu.memory_space<vmem>>) attributes {dimension_semantics = [#tpu.dimension_semantics<arbitrary>, #tpu.dimension_semantics<arbitrary>], iteration_bounds = array<i64: 2, 1>, scalar_prefetch = 0 : i64, scratch_operands = 4 : i64, tpu.core_type = #tpu.core_type<tc>, window_params = [{transform_indices = @transform_0, window_bounds = array<i64: 9, 1, 4, 256>}, {pipeline_mode = #tpu.pipeline_mode<synchronous>, transform_indices = @transform_1, window_bounds = array<i64: 9, 8, 4>}, {transform_indices = @transform_2, window_bounds = array<i64: 1, 8, 256>}, {pipeline_mode = #tpu.pipeline_mode<synchronous>, transform_indices = @transform_3, window_bounds = array<i64: 8, 1>}, {pipeline_mode = #tpu.pipeline_mode<synchronous>, transform_indices = @transform_4, window_bounds = array<i64: 8, 1>}]} {
    %cst = arith.constant 0.000000e+00 : f32
    %0 = vector.broadcast %cst : f32 to vector<8x256xf32>
    %c0 = arith.constant 0 : index
    %c0_0 = arith.constant 0 : index
    %c0_1 = arith.constant 0 : index
    %1 = vector.load %arg3[%c0, %c0_0, %c0_1] : memref<9x8x4xbf16, #tpu.memory_space<vmem>>, vector<1x8x4xbf16>
    %2 = vector.shape_cast %1 : vector<1x8x4xbf16> to vector<8x4xbf16>
    %c0_2 = arith.constant 0 : index
    %c0_3 = arith.constant 0 : index
    %c0_4 = arith.constant 0 : index
    %c0_5 = arith.constant 0 : index
    %3 = vector.load %arg2[%c0_2, %c0_3, %c0_4, %c0_5] : memref<9x1x4x256xbf16, #tpu.memory_space<vmem>>, vector<1x1x4x256xbf16>
    %4 = vector.shape_cast %3 : vector<1x1x4x256xbf16> to vector<4x256xbf16>
    %cst_6 = arith.constant dense<0.000000e+00> : vector<8x256xf32>
    %5 = tpu.matmul %2, %4, %cst_6 {dimension_numbers = #tpu.dot_dimension_numbers<[1], [0], [0], [1], [0, 0, 1, 1], [], []>} : vector<8x4xbf16>, vector<4x256xbf16>, vector<8x256xf32> -> vector<8x256xf32>
    %6 = arith.addf %0, %5 : vector<8x256xf32>
    %c1 = arith.constant 1 : index
    %c0_7 = arith.constant 0 : index
    %c0_8 = arith.constant 0 : index
    %7 = vector.load %arg3[%c1, %c0_7, %c0_8] : memref<9x8x4xbf16, #tpu.memory_space<vmem>>, vector<1x8x4xbf16>
    %8 = vector.shape_cast %7 : vector<1x8x4xbf16> to vector<8x4xbf16>
    %c1_9 = arith.constant 1 : index
    %c0_10 = arith.constant 0 : index
    %c0_11 = arith.constant 0 : index
    %c0_12 = arith.constant 0 : index
    %9 = vector.load %arg2[%c1_9, %c0_10, %c0_11, %c0_12] : memref<9x1x4x256xbf16, #tpu.memory_space<vmem>>, vector<1x1x4x256xbf16>
    %10 = vector.shape_cast %9 : vector<1x1x4x256xbf16> to vector<4x256xbf16>
    %cst_13 = arith.constant dense<0.000000e+00> : vector<8x256xf32>
    %11 = tpu.matmul %8, %10, %cst_13 {dimension_numbers = #tpu.dot_dimension_numbers<[1], [0], [0], [1], [0, 0, 1, 1], [], []>} : vector<8x4xbf16>, vector<4x256xbf16>, vector<8x256xf32> -> vector<8x256xf32>
    %12 = arith.addf %6, %11 : vector<8x256xf32>
    %c2 = arith.constant 2 : index
    %c0_14 = arith.constant 0 : index
    %c0_15 = arith.constant 0 : index
    %13 = vector.load %arg3[%c2, %c0_14, %c0_15] : memref<9x8x4xbf16, #tpu.memory_space<vmem>>, vector<1x8x4xbf16>
    %14 = vector.shape_cast %13 : vector<1x8x4xbf16> to vector<8x4xbf16>
    %c2_16 = arith.constant 2 : index
    %c0_17 = arith.constant 0 : index
    %c0_18 = arith.constant 0 : index
    %c0_19 = arith.constant 0 : index
    %15 = vector.load %arg2[%c2_16, %c0_17, %c0_18, %c0_19] : memref<9x1x4x256xbf16, #tpu.memory_space<vmem>>, vector<1x1x4x256xbf16>
    %16 = vector.shape_cast %15 : vector<1x1x4x256xbf16> to vector<4x256xbf16>
    %cst_20 = arith.constant dense<0.000000e+00> : vector<8x256xf32>
    %17 = tpu.matmul %14, %16, %cst_20 {dimension_numbers = #tpu.dot_dimension_numbers<[1], [0], [0], [1], [0, 0, 1, 1], [], []>} : vector<8x4xbf16>, vector<4x256xbf16>, vector<8x256xf32> -> vector<8x256xf32>
    %18 = arith.addf %12, %17 : vector<8x256xf32>
    %c3 = arith.constant 3 : index
    %c0_21 = arith.constant 0 : index
    %c0_22 = arith.constant 0 : index
    %19 = vector.load %arg3[%c3, %c0_21, %c0_22] : memref<9x8x4xbf16, #tpu.memory_space<vmem>>, vector<1x8x4xbf16>
    %20 = vector.shape_cast %19 : vector<1x8x4xbf16> to vector<8x4xbf16>
    %c3_23 = arith.constant 3 : index
    %c0_24 = arith.constant 0 : index
    %c0_25 = arith.constant 0 : index
    %c0_26 = arith.constant 0 : index
    %21 = vector.load %arg2[%c3_23, %c0_24, %c0_25, %c0_26] : memref<9x1x4x256xbf16, #tpu.memory_space<vmem>>, vector<1x1x4x256xbf16>
    %22 = vector.shape_cast %21 : vector<1x1x4x256xbf16> to vector<4x256xbf16>
    %cst_27 = arith.constant dense<0.000000e+00> : vector<8x256xf32>
    %23 = tpu.matmul %20, %22, %cst_27 {dimension_numbers = #tpu.dot_dimension_numbers<[1], [0], [0], [1], [0, 0, 1, 1], [], []>} : vector<8x4xbf16>, vector<4x256xbf16>, vector<8x256xf32> -> vector<8x256xf32>
    %24 = arith.addf %18, %23 : vector<8x256xf32>
    %c4 = arith.constant 4 : index
    %c0_28 = arith.constant 0 : index
    %c0_29 = arith.constant 0 : index
    %25 = vector.load %arg3[%c4, %c0_28, %c0_29] : memref<9x8x4xbf16, #tpu.memory_space<vmem>>, vector<1x8x4xbf16>
    %26 = vector.shape_cast %25 : vector<1x8x4xbf16> to vector<8x4xbf16>
    %c4_30 = arith.constant 4 : index
    %c0_31 = arith.constant 0 : index
    %c0_32 = arith.constant 0 : index
    %c0_33 = arith.constant 0 : index
    %27 = vector.load %arg2[%c4_30, %c0_31, %c0_32, %c0_33] : memref<9x1x4x256xbf16, #tpu.memory_space<vmem>>, vector<1x1x4x256xbf16>
    %28 = vector.shape_cast %27 : vector<1x1x4x256xbf16> to vector<4x256xbf16>
    %cst_34 = arith.constant dense<0.000000e+00> : vector<8x256xf32>
    %29 = tpu.matmul %26, %28, %cst_34 {dimension_numbers = #tpu.dot_dimension_numbers<[1], [0], [0], [1], [0, 0, 1, 1], [], []>} : vector<8x4xbf16>, vector<4x256xbf16>, vector<8x256xf32> -> vector<8x256xf32>
    %30 = arith.addf %24, %29 : vector<8x256xf32>
    %c5 = arith.constant 5 : index
    %c0_35 = arith.constant 0 : index
    %c0_36 = arith.constant 0 : index
    %31 = vector.load %arg3[%c5, %c0_35, %c0_36] : memref<9x8x4xbf16, #tpu.memory_space<vmem>>, vector<1x8x4xbf16>
    %32 = vector.shape_cast %31 : vector<1x8x4xbf16> to vector<8x4xbf16>
    %c5_37 = arith.constant 5 : index
    %c0_38 = arith.constant 0 : index
    %c0_39 = arith.constant 0 : index
    %c0_40 = arith.constant 0 : index
    %33 = vector.load %arg2[%c5_37, %c0_38, %c0_39, %c0_40] : memref<9x1x4x256xbf16, #tpu.memory_space<vmem>>, vector<1x1x4x256xbf16>
    %34 = vector.shape_cast %33 : vector<1x1x4x256xbf16> to vector<4x256xbf16>
    %cst_41 = arith.constant dense<0.000000e+00> : vector<8x256xf32>
    %35 = tpu.matmul %32, %34, %cst_41 {dimension_numbers = #tpu.dot_dimension_numbers<[1], [0], [0], [1], [0, 0, 1, 1], [], []>} : vector<8x4xbf16>, vector<4x256xbf16>, vector<8x256xf32> -> vector<8x256xf32>
    %36 = arith.addf %30, %35 : vector<8x256xf32>
    %c6 = arith.constant 6 : index
    %c0_42 = arith.constant 0 : index
    %c0_43 = arith.constant 0 : index
    %37 = vector.load %arg3[%c6, %c0_42, %c0_43] : memref<9x8x4xbf16, #tpu.memory_space<vmem>>, vector<1x8x4xbf16>
    %38 = vector.shape_cast %37 : vector<1x8x4xbf16> to vector<8x4xbf16>
    %c6_44 = arith.constant 6 : index
    %c0_45 = arith.constant 0 : index
    %c0_46 = arith.constant 0 : index
    %c0_47 = arith.constant 0 : index
    %39 = vector.load %arg2[%c6_44, %c0_45, %c0_46, %c0_47] : memref<9x1x4x256xbf16, #tpu.memory_space<vmem>>, vector<1x1x4x256xbf16>
    %40 = vector.shape_cast %39 : vector<1x1x4x256xbf16> to vector<4x256xbf16>
    %cst_48 = arith.constant dense<0.000000e+00> : vector<8x256xf32>
    %41 = tpu.matmul %38, %40, %cst_48 {dimension_numbers = #tpu.dot_dimension_numbers<[1], [0], [0], [1], [0, 0, 1, 1], [], []>} : vector<8x4xbf16>, vector<4x256xbf16>, vector<8x256xf32> -> vector<8x256xf32>
    %42 = arith.addf %36, %41 : vector<8x256xf32>
    %c7 = arith.constant 7 : index
    %c0_49 = arith.constant 0 : index
    %c0_50 = arith.constant 0 : index
    %43 = vector.load %arg3[%c7, %c0_49, %c0_50] : memref<9x8x4xbf16, #tpu.memory_space<vmem>>, vector<1x8x4xbf16>
    %44 = vector.shape_cast %43 : vector<1x8x4xbf16> to vector<8x4xbf16>
    %c7_51 = arith.constant 7 : index
    %c0_52 = arith.constant 0 : index
    %c0_53 = arith.constant 0 : index
    %c0_54 = arith.constant 0 : index
    %45 = vector.load %arg2[%c7_51, %c0_52, %c0_53, %c0_54] : memref<9x1x4x256xbf16, #tpu.memory_space<vmem>>, vector<1x1x4x256xbf16>
    %46 = vector.shape_cast %45 : vector<1x1x4x256xbf16> to vector<4x256xbf16>
    %cst_55 = arith.constant dense<0.000000e+00> : vector<8x256xf32>
    %47 = tpu.matmul %44, %46, %cst_55 {dimension_numbers = #tpu.dot_dimension_numbers<[1], [0], [0], [1], [0, 0, 1, 1], [], []>} : vector<8x4xbf16>, vector<4x256xbf16>, vector<8x256xf32> -> vector<8x256xf32>
    %48 = arith.addf %42, %47 : vector<8x256xf32>
    %c8 = arith.constant 8 : index
    %c0_56 = arith.constant 0 : index
    %c0_57 = arith.constant 0 : index
    %49 = vector.load %arg3[%c8, %c0_56, %c0_57] : memref<9x8x4xbf16, #tpu.memory_space<vmem>>, vector<1x8x4xbf16>
    %50 = vector.shape_cast %49 : vector<1x8x4xbf16> to vector<8x4xbf16>
    %c8_58 = arith.constant 8 : index
    %c0_59 = arith.constant 0 : index
    %c0_60 = arith.constant 0 : index
    %c0_61 = arith.constant 0 : index
    %51 = vector.load %arg2[%c8_58, %c0_59, %c0_60, %c0_61] : memref<9x1x4x256xbf16, #tpu.memory_space<vmem>>, vector<1x1x4x256xbf16>
    %52 = vector.shape_cast %51 : vector<1x1x4x256xbf16> to vector<4x256xbf16>
    %cst_62 = arith.constant dense<0.000000e+00> : vector<8x256xf32>
    %53 = tpu.matmul %50, %52, %cst_62 {dimension_numbers = #tpu.dot_dimension_numbers<[1], [0], [0], [1], [0, 0, 1, 1], [], []>} : vector<8x4xbf16>, vector<4x256xbf16>, vector<8x256xf32> -> vector<8x256xf32>
    %54 = arith.addf %48, %53 : vector<8x256xf32>
    %55 = arith.truncf %54 : vector<8x256xf32> to vector<8x256xbf16>
    %c0_63 = arith.constant 0 : index
    %c0_64 = arith.constant 0 : index
    %c0_65 = arith.constant 0 : index
    %56 = vector.load %arg4[%c0_63, %c0_64, %c0_65] : memref<1x8x256xbf16, #tpu.memory_space<vmem>>, vector<1x8x256xbf16>
    %57 = vector.shape_cast %56 : vector<1x8x256xbf16> to vector<8x256xbf16>
    %58 = vector.shape_cast %55 : vector<8x256xbf16> to vector<1x8x256xbf16>
    tpu.vector_store %arg4[%c0_63, %c0_64, %c0_65], %58 {strides = array<i32>} : memref<1x8x256xbf16, #tpu.memory_space<vmem>>, vector<1x8x256xbf16>,
    %cst_66 = arith.constant dense<0.000000e+00> : vector<8xf32>
    %59 = vector.multi_reduction <add>, %54, %cst_66 [1] : vector<8x256xf32> to vector<8xf32>
    %60 = vector.shape_cast %59 : vector<8xf32> to vector<8x1xf32>
    %cst_67 = arith.constant 3.906250e-03 : f32
    %61 = vector.broadcast %cst_67 : f32 to vector<8x1xf32>
    %62 = arith.mulf %60, %61 : vector<8x1xf32>
    %63 = vector.broadcast %62 : vector<8x1xf32> to vector<8x256xf32>
    %64 = arith.subf %54, %63 : vector<8x256xf32>
    %c0_68 = arith.constant 0 : index
    %c0_69 = arith.constant 0 : index
    %65 = vector.load %arg9[%c0_68, %c0_69] : memref<8x1xf32, #tpu.memory_space<vmem>>, vector<8x1xf32>
    tpu.vector_store %arg9[%c0_68, %c0_69], %62 {strides = array<i32>} : memref<8x1xf32, #tpu.memory_space<vmem>>, vector<8x1xf32>,
    %66 = arith.mulf %64, %64 : vector<8x256xf32>
    %cst_70 = arith.constant dense<0.000000e+00> : vector<8xf32>
    %67 = vector.multi_reduction <add>, %66, %cst_70 [1] : vector<8x256xf32> to vector<8xf32>
    %68 = vector.shape_cast %67 : vector<8xf32> to vector<8x1xf32>
    %c0_71 = arith.constant 0 : index
    %c0_72 = arith.constant 0 : index
    %69 = vector.load %arg10[%c0_71, %c0_72] : memref<8x1xf32, #tpu.memory_space<vmem>>, vector<8x1xf32>
    tpu.vector_store %arg10[%c0_71, %c0_72], %68 {strides = array<i32>} : memref<8x1xf32, #tpu.memory_space<vmem>>, vector<8x1xf32>,
    %c1_i32 = arith.constant 1 : i32
    %70 = arith.muli %arg0, %c1_i32 : i32
    %71 = arith.addi %70, %arg1 : i32
    %c0_i32 = arith.constant 0 : i32
    %72 = arith.cmpi eq, %71, %c0_i32 : i32
    %73 = arith.extui %72 : i1 to i32
    %c0_i32_73 = arith.constant 0 : i32
    %74 = arith.cmpi ne, %73, %c0_i32_73 : i32
    scf.if %74 {
      %c0_79 = arith.constant 0 : index
      %c0_80 = arith.constant 0 : index
      %81 = vector.load %arg9[%c0_79, %c0_80] : memref<8x1xf32, #tpu.memory_space<vmem>>, vector<8x1xf32>
      %c0_81 = arith.constant 0 : index
      %c0_82 = arith.constant 0 : index
      %82 = vector.load %arg7[%c0_81, %c0_82] : memref<8x1xf32, #tpu.memory_space<vmem>>, vector<8x1xf32>
      tpu.vector_store %arg7[%c0_81, %c0_82], %81 {strides = array<i32>} : memref<8x1xf32, #tpu.memory_space<vmem>>, vector<8x1xf32>,
      %c0_83 = arith.constant 0 : index
      %c0_84 = arith.constant 0 : index
      %83 = vector.load %arg10[%c0_83, %c0_84] : memref<8x1xf32, #tpu.memory_space<vmem>>, vector<8x1xf32>
      %c0_85 = arith.constant 0 : index
      %c0_86 = arith.constant 0 : index
      %84 = vector.load %arg8[%c0_85, %c0_86] : memref<8x1xf32, #tpu.memory_space<vmem>>, vector<8x1xf32>
      tpu.vector_store %arg8[%c0_85, %c0_86], %83 {strides = array<i32>} : memref<8x1xf32, #tpu.memory_space<vmem>>, vector<8x1xf32>,
    } else {
    }
    %c0_i32_74 = arith.constant 0 : i32
    %75 = arith.cmpi sgt, %71, %c0_i32_74 : i32
    %76 = arith.extui %75 : i1 to i32
    %cst_75 = arith.constant 2.560000e+02 : f32
    %c0_i32_76 = arith.constant 0 : i32
    %77 = arith.cmpi ne, %76, %c0_i32_76 : i32
    scf.if %77 {
      %81 = arith.sitofp %arg0 : i32 to f32
      %cst_79 = arith.constant 2.560000e+02 : f32
      %82 = arith.mulf %81, %cst_79 : f32
      %83 = arith.sitofp %arg1 : i32 to f32
      %cst_80 = arith.constant 2.560000e+02 : f32
      %84 = arith.mulf %83, %cst_80 : f32
      %85 = arith.addf %82, %84 : f32
      %86 = arith.addf %85, %cst_75 : f32
      %c0_81 = arith.constant 0 : index
      %c0_82 = arith.constant 0 : index
      %87 = vector.load %arg9[%c0_81, %c0_82] : memref<8x1xf32, #tpu.memory_space<vmem>>, vector<8x1xf32>
      %c0_83 = arith.constant 0 : index
      %c0_84 = arith.constant 0 : index
      %88 = vector.load %arg7[%c0_83, %c0_84] : memref<8x1xf32, #tpu.memory_space<vmem>>, vector<8x1xf32>
      %89 = arith.subf %87, %88 : vector<8x1xf32>
      %c0_85 = arith.constant 0 : index
      %c0_86 = arith.constant 0 : index
      %90 = vector.load %arg7[%c0_85, %c0_86] : memref<8x1xf32, #tpu.memory_space<vmem>>, vector<8x1xf32>
      %91 = arith.divf %cst_75, %86 : f32
      %92 = vector.broadcast %91 : f32 to vector<8x1xf32>
      %93 = arith.mulf %89, %92 : vector<8x1xf32>
      %94 = arith.addf %90, %93 : vector<8x1xf32>
      %c0_87 = arith.constant 0 : index
      %c0_88 = arith.constant 0 : index
      %95 = vector.load %arg7[%c0_87, %c0_88] : memref<8x1xf32, #tpu.memory_space<vmem>>, vector<8x1xf32>
      tpu.vector_store %arg7[%c0_87, %c0_88], %94 {strides = array<i32>} : memref<8x1xf32, #tpu.memory_space<vmem>>, vector<8x1xf32>,
      %c0_89 = arith.constant 0 : index
      %c0_90 = arith.constant 0 : index
      %96 = vector.load %arg8[%c0_89, %c0_90] : memref<8x1xf32, #tpu.memory_space<vmem>>, vector<8x1xf32>
      %c0_91 = arith.constant 0 : index
      %c0_92 = arith.constant 0 : index
      %97 = vector.load %arg10[%c0_91, %c0_92] : memref<8x1xf32, #tpu.memory_space<vmem>>, vector<8x1xf32>
      %98 = arith.addf %96, %97 : vector<8x1xf32>
      %99 = arith.mulf %89, %89 : vector<8x1xf32>
      %100 = arith.mulf %85, %cst_75 : f32
      %101 = arith.divf %100, %86 : f32
      %102 = vector.broadcast %101 : f32 to vector<8x1xf32>
      %103 = arith.mulf %99, %102 : vector<8x1xf32>
      %104 = arith.addf %98, %103 : vector<8x1xf32>
      %c0_93 = arith.constant 0 : index
      %c0_94 = arith.constant 0 : index
      %105 = vector.load %arg8[%c0_93, %c0_94] : memref<8x1xf32, #tpu.memory_space<vmem>>, vector<8x1xf32>
      tpu.vector_store %arg8[%c0_93, %c0_94], %104 {strides = array<i32>} : memref<8x1xf32, #tpu.memory_space<vmem>>, vector<8x1xf32>,
    } else {
    }
    %c1_i32_77 = arith.constant 1 : i32
    %78 = arith.cmpi eq, %71, %c1_i32_77 : i32
    %79 = arith.extui %78 : i1 to i32
    %c0_i32_78 = arith.constant 0 : i32
    %80 = arith.cmpi ne, %79, %c0_i32_78 : i32
    scf.if %80 {
      %c0_79 = arith.constant 0 : index
      %c0_80 = arith.constant 0 : index
      %81 = vector.load %arg7[%c0_79, %c0_80] : memref<8x1xf32, #tpu.memory_space<vmem>>, vector<8x1xf32>
      %c0_81 = arith.constant 0 : index
      %c0_82 = arith.constant 0 : index
      %82 = vector.load %arg5[%c0_81, %c0_82] : memref<8x1xf32, #tpu.memory_space<vmem>>, vector<8x1xf32>
      tpu.vector_store %arg5[%c0_81, %c0_82], %81 {strides = array<i32>} : memref<8x1xf32, #tpu.memory_space<vmem>>, vector<8x1xf32>,
      %c0_83 = arith.constant 0 : index
      %c0_84 = arith.constant 0 : index
      %83 = vector.load %arg8[%c0_83, %c0_84] : memref<8x1xf32, #tpu.memory_space<vmem>>, vector<8x1xf32>
      %cst_85 = arith.constant 0.001953125 : f32
      %84 = vector.broadcast %cst_85 : f32 to vector<8x1xf32>
      %85 = arith.mulf %83, %84 : vector<8x1xf32>
      %cst_86 = arith.constant 9.99999974E-6 : f32
      %86 = vector.broadcast %cst_86 : f32 to vector<8x1xf32>
      %87 = arith.addf %85, %86 : vector<8x1xf32>
      %88 = math.rsqrt %87 : vector<8x1xf32>
      %c0_87 = arith.constant 0 : index
      %c0_88 = arith.constant 0 : index
      %89 = vector.load %arg6[%c0_87, %c0_88] : memref<8x1xf32, #tpu.memory_space<vmem>>, vector<8x1xf32>
      tpu.vector_store %arg6[%c0_87, %c0_88], %88 {strides = array<i32>} : memref<8x1xf32, #tpu.memory_space<vmem>>, vector<8x1xf32>,
    } else {
    }
    return
  }
  func.func @transform_0(%arg0: i32, %arg1: i32) -> (i32, i32, i32, i32) {
    %c0_i32 = arith.constant 0 : i32
    %c0_i32_0 = arith.constant 0 : i32
    %c0_i32_1 = arith.constant 0 : i32
    return %c0_i32, %arg0, %c0_i32_0, %arg1 : i32, i32, i32, i32
  }
  func.func @transform_1(%arg0: i32, %arg1: i32) -> (i32, i32, i32) {
    %c0_i32 = arith.constant 0 : i32
    %c0_i32_0 = arith.constant 0 : i32
    %c0_i32_1 = arith.constant 0 : i32
    %c0_i32_2 = arith.constant 0 : i32
    return %c0_i32, %c0_i32_0, %c0_i32_1 : i32, i32, i32
  }
  func.func @transform_2(%arg0: i32, %arg1: i32) -> (i32, i32, i32) {
    %c0_i32 = arith.constant 0 : i32
    %c0_i32_0 = arith.constant 0 : i32
    return %arg0, %c0_i32, %arg1 : i32, i32, i32
  }
  func.func @transform_3(%arg0: i32, %arg1: i32) -> (i32, i32) {
    %c0_i32 = arith.constant 0 : i32
    %c0_i32_0 = arith.constant 0 : i32
    %c0_i32_1 = arith.constant 0 : i32
    return %c0_i32, %c0_i32_0 : i32, i32
  }
  func.func @transform_4(%arg0: i32, %arg1: i32) -> (i32, i32) {
    %c0_i32 = arith.constant 0 : i32
    %c0_i32_0 = arith.constant 0 : i32
    %c0_i32_1 = arith.constant 0 : i32
    return %c0_i32, %c0_i32_0 : i32, i32
  }
}

</mosaic_0001>

<llo_original>
// kernel: tpu_custom_call.1
$region0: #{tpu_custom_call.1}
  #allocation0 [shape = 'u32[]', space=smem, size = 0x4, offset = 0x4, fixed_abs, tag = 'smem constant byte address 0x4 - core index']
  #allocation1 [shape = 'u32[72,128]{1,0:T(1,128)}', space=vmem, size = 0x9000, scoped, tag = 'internal scratch']
  #allocation2 [shape = 'f32[8,1]{1,0:T(8,128)}', space=vmem, size = 0x1000, scoped, tag = 'scratch operand']
  #allocation3 [shape = 'f32[8,1]{1,0:T(8,128)}', space=vmem, size = 0x1000, scoped, tag = 'scratch operand']
  #allocation4 [shape = 'f32[8,1]{1,0:T(8,128)}', space=vmem, size = 0x1000, scoped, tag = 'scratch operand']
  #allocation5 [shape = 'f32[8,1]{1,0:T(8,128)}', space=vmem, size = 0x1000, scoped, tag = 'scratch operand']
  %s0 = inlined_call_operand.hbm [shape: bf16[9,2,4,256], index: 0, kind: input, shape index: {}]
  %s1 = inlined_call_operand.vmem [shape: bf16[9,8,4], index: 1, kind: input, shape index: {}]
  %s2 = inlined_call_operand.hbm [shape: bf16[2,8,256], index: 2, kind: output, shape index: {0}]
  %s3 = inlined_call_operand.vmem [shape: f32[8,1], index: 3, kind: output, shape index: {1}]
  %s4 = inlined_call_operand.vmem [shape: f32[8,1], index: 4, kind: output, shape index: {2}]
  %5 = xla_tuple %s2, %s3, %s4
  %s6 = sld [smem:[#allocation0]]
  $region73: #{tpu_custom_call.1} parent=0
    _
  %s8 = ssub.s32 1, %s6
  %s9 = scalar_select 0, %s8, %s6
  $region1: #{tpu_custom_call.1} parent=0
    #allocation6 [shape = 'u8[36864]{0}', space=vmem, size = 0x9000, scoped, tag = 'input window, operand 0']
    #allocation7 [shape = 's32[2]{0}', space=sflag, size = 0x8, scoped, tag = 'scoped memory for tpu_custom_call.1']
    #allocation8 [shape = 's32[2]{0}', space=sflag, size = 0x8, scoped, tag = 'scoped memory for tpu_custom_call.1']
    #allocation9 [shape = 'u8[8192]{0}', space=vmem, size = 0x2000, scoped, tag = 'output window, operand 0']
    %10 = vsyncpa [#allocation7], 0
    %s11 = scalar_lea.sflag [#allocation7], 1
    %12 = vsyncpa %s11, 0
    %13 = vsyncpa [#allocation8], 0
    %s14 = scalar_lea.sflag [#allocation8], 1
    %15 = vsyncpa %s14, 0
    loop: start=0, step=1, limit=4
    $region2: #{tpu_custom_call.1} parent=1 // loop_pre_header
      _
    $region3: #{tpu_custom_call.1} parent=1 // loop_header
      %s17 = sphi 0, %s21
      %p18 = scmp.ge.s32.totalorder %s17, 4
      %s24 = sphi 0, %s36
      %s25 = sphi 0, %s32
      %s26 = sphi 0, %s24
      %s27 = sphi 0, %s25
      %s28 = sphi 0, %s26
      %s29 = sphi 0, %s27
      %s41 = sphi 0, %s43
      %s44 = sphi 0, %s41
      %s45 = sphi 0, %s44
      %s61 = sphi 0, %s45
      %s65 = sphi 0, %s65
      %s67 = sphi 0, %s65
      %s68 = sphi 0, %s67
      %s82 = sphi 0, %s68
      %s90 = sphi 0, %s92
      %s93 = sphi 0, %s90
      %s94 = sphi 0, %s93
      %s110 = sphi 0, %s94
      %s114 = sphi 0, %s114
      %s116 = sphi 0, %s114
      %s117 = sphi 0, %s116
      %s131 = sphi 0, %s117
      %s135 = sphi 0, %s135
      %s137 = sphi 0, %s135
      %s138 = sphi 0, %s137
      %s152 = sphi 0, %s138
    $region4: #{tpu_custom_call.1} parent=1 // loop_header_branch
      %20 = sbr.rel (%p18) target = $region8
    $region5: #{tpu_custom_call.1} parent=1 // loop_body
      %s22 = ssub.s32 %s17, 1
      %s23 = ssub.s32 %s17, 2
      %s30 = sadd.s32 1, %s25
      %p31 = scmp.ge.s32.totalorder %s30, 1
      %s32 = scalar_select %p31, 0, %s30
      %s33 = sadd.s32 1, %s24
      %s34 = scalar_select %p31, %s33, %s24
      %p35 = scmp.ge.s32.totalorder %s34, 2
      %s36 = scalar_select %p35, 0, %s34
      %s37 = ssub.s32 %s24, %s36
      %s38 = ssub.s32 %s25, %s32
      %s39 = sor.u32 %s37, %s38
      %p40 = scmp.eq.s32.totalorder %s39, 0
      %s42 = sadd.s32 %s41, 1
      %s43 = scalar_select %p40, %s41, %s42
      %p46 = pneg %p40
      %p47 = scmp.eq.s32.totalorder %s17, 1
      %p48 = por %p46, %p47
      %p49 = scmp.ne.s32.totalorder %s41, %s44
      %p50 = scmp.eq.s32.totalorder %s17, 0
      %p51 = por %p49, %p50
      %p52 = scmp.ne.s32.totalorder %s41, %s44
      %p53 = scmp.eq.s32.totalorder %s22, 1
      %p54 = por %p52, %p53
      %p55 = scmp.ne.s32.totalorder %s44, %s45
      %p56 = scmp.eq.s32.totalorder %s22, 0
      %p57 = por %p55, %p56
      %p58 = scmp.ne.s32.totalorder %s44, %s45
      %p59 = scmp.eq.s32.totalorder %s23, 1
      %p60 = por %p58, %p59
      %p62 = scmp.ne.s32.totalorder %s45, %s61
      %p63 = scmp.eq.s32.totalorder %s23, 0
      %p64 = por %p62, %p63
      %s66 = sadd.s32 %s65, 1
      %p69 = scmp.eq.s32.totalorder %s17, 1
      %p70 = scmp.ne.s32.totalorder %s65, %s67
      %p71 = scmp.eq.s32.totalorder %s17, 0
      %p72 = por %p70, %p71
      %p73 = scmp.ne.s32.totalorder %s65, %s67
      %p74 = scmp.eq.s32.totalorder %s22, 1
      %p75 = por %p73, %p74
      %p76 = scmp.ne.s32.totalorder %s67, %s68
      %p77 = scmp.eq.s32.totalorder %s22, 0
      %p78 = por %p76, %p77
      %p79 = scmp.ne.s32.totalorder %s67, %s68
      %p80 = scmp.eq.s32.totalorder %s23, 1
      %p81 = por %p79, %p80
      %p83 = scmp.ne.s32.totalorder %s68, %s82
      %p84 = scmp.eq.s32.totalorder %s23, 0
      %p85 = por %p83, %p84
      %s86 = ssub.s32 %s24, %s36
      %s87 = ssub.s32 %s25, %s32
      %s88 = sor.u32 %s86, %s87
      %p89 = scmp.eq.s32.totalorder %s88, 0
      %s91 = sadd.s32 %s90, 1
      %s92 = scalar_select %p89, %s90, %s91
      %p95 = pneg %p89
      %p96 = scmp.eq.s32.totalorder %s17, 1
      %p97 = por %p95, %p96
      %p98 = scmp.ne.s32.totalorder %s90, %s93
      %p99 = scmp.eq.s32.totalorder %s17, 0
      %p100 = por %p98, %p99
      %p101 = scmp.ne.s32.totalorder %s90, %s93
      %p102 = scmp.eq.s32.totalorder %s22, 1
      %p103 = por %p101, %p102
      %p104 = scmp.ne.s32.totalorder %s93, %s94
      %p105 = scmp.eq.s32.totalorder %s22, 0
      %p106 = por %p104, %p105
      %p107 = scmp.ne.s32.totalorder %s93, %s94
      %p108 = scmp.eq.s32.totalorder %s23, 1
      %p109 = por %p107, %p108
      %p111 = scmp.ne.s32.totalorder %s94, %s110
      %p112 = scmp.eq.s32.totalorder %s23, 0
      %p113 = por %p111, %p112
      %s115 = sadd.s32 %s114, 1
      %p118 = scmp.eq.s32.totalorder %s17, 1
      %p119 = scmp.ne.s32.totalorder %s114, %s116
      %p120 = scmp.eq.s32.totalorder %s17, 0
      %p121 = por %p119, %p120
      %p122 = scmp.ne.s32.totalorder %s114, %s116
      %p123 = scmp.eq.s32.totalorder %s22, 1
      %p124 = por %p122, %p123
      %p125 = scmp.ne.s32.totalorder %s116, %s117
      %p126 = scmp.eq.s32.totalorder %s22, 0
      %p127 = por %p125, %p126
      %p128 = scmp.ne.s32.totalorder %s116, %s117
      %p129 = scmp.eq.s32.totalorder %s23, 1
      %p130 = por %p128, %p129
      %p132 = scmp.ne.s32.totalorder %s117, %s131
      %p133 = scmp.eq.s32.totalorder %s23, 0
      %p134 = por %p132, %p133
      %s136 = sadd.s32 %s135, 1
      %p139 = scmp.eq.s32.totalorder %s17, 1
      %p140 = scmp.ne.s32.totalorder %s135, %s137
      %p141 = scmp.eq.s32.totalorder %s17, 0
      %p142 = por %p140, %p141
      %p143 = scmp.ne.s32.totalorder %s135, %s137
      %p144 = scmp.eq.s32.totalorder %s22, 1
      %p145 = por %p143, %p144
      %p146 = scmp.ne.s32.totalorder %s137, %s138
      %p147 = scmp.eq.s32.totalorder %s22, 0
      %p148 = por %p146, %p147
      %p149 = scmp.ne.s32.totalorder %s137, %s138
      %p150 = scmp.eq.s32.totalorder %s23, 1
      %p151 = por %p149, %p150
      %p153 = scmp.ne.s32.totalorder %s138, %s152
      %p154 = scmp.eq.s32.totalorder %s23, 0
      %p155 = por %p153, %p154
      %p156 = scmp.le.s32.totalorder 1, %s17
      %p157 = scmp.lt.s32.totalorder %s17, 3
      %p158 = pnand %p156, %p157
      %p159 = pneg %p158
      // Predicated region
      $region9: #{tpu_custom_call.1} parent=5 // pred_check
        _
      $region10: #{tpu_custom_call.1} parent=5 // pred_check_branch
        %161 = sbr.rel (%p158) target = $region12
      $region11: #{tpu_custom_call.1} parent=5 // pred_region
        %s162 = ssub.s32 %s17, 1
        // Predicated region
        $region13: #{tpu_custom_call.1} parent=11 // pred_check
          %p163 = pneg %p78
        $region14: #{tpu_custom_call.1} parent=11 // pred_check_branch
          %165 = sbr.rel (%p163) target = $region16
        $region15: #{tpu_custom_call.1} parent=11 // pred_region
          _
        $region16: #{tpu_custom_call.1} parent=11 // pred_fallthru
          _
      $region12: #{tpu_custom_call.1} parent=5 // pred_fallthru
        _
      %p166 = scmp.lt.s32.totalorder %s17, 2
      // Predicated region
      $region17: #{tpu_custom_call.1} parent=5 // pred_check
        %p167 = pneg %p166
      $region18: #{tpu_custom_call.1} parent=5 // pred_check_branch
        %169 = sbr.rel (%p167) target = $region20
      $region19: #{tpu_custom_call.1} parent=5 // pred_region
        // Predicated region
        $region21: #{tpu_custom_call.1} parent=19 // pred_check
          %p170 = pneg %p51
        $region22: #{tpu_custom_call.1} parent=19 // pred_check_branch
          %172 = sbr.rel (%p170) target = $region24
        $region23: #{tpu_custom_call.1} parent=19 // pred_region
          %s173 = sand.u32 %s41, 1
          %s174 = scalar_lea.sflag [#allocation7], %s173
          %s175 = sand.u32 %s41, 1
          %s176 = smul.addr %s175, 36
          %s177 = scalar_lea.vmem [#allocation6], %s176
          %s178 = smul.u32 2, %s25
          %180 = vsyncadd %s174, 0
          %s181 = smul.addr %s24, 2
          %s182 = sadd.s32 %s178, %s181
          %s183 = smul.addr %s182, 2
          %s184 = scalar_lea.hbm %s0, %s183
          %s185 = sshll.u32 %s184, 4
          %s186 = int_to_ptr.hbm [resolvable:$true] %s185
          %s187 = sshll.u32 %s177, 4
          %s188 = int_to_ptr.vmem [resolvable:$true] %s187
          %193 = dma.hbm_to_vmem [thread:$0]  %s186, 576, %s188, %s174, 128, 64, 4
        $region24: #{tpu_custom_call.1} parent=19 // pred_fallthru
          _
      $region20: #{tpu_custom_call.1} parent=5 // pred_fallthru
        _
      %p194 = scmp.le.s32.totalorder 1, %s17
      %p195 = scmp.lt.s32.totalorder %s17, 3
      %p196 = pnand %p194, %p195
      %p197 = pneg %p196
      // Predicated region
      $region25: #{tpu_custom_call.1} parent=5 // pred_check
        _
      $region26: #{tpu_custom_call.1} parent=5 // pred_check_branch
        %199 = sbr.rel (%p196) target = $region28
      $region27: #{tpu_custom_call.1} parent=5 // pred_region
        %s200 = ssub.s32 %s17, 1
        %s201 = sand.u32 %s44, 1
        %s202 = scalar_lea.sflag [#allocation7], %s201
        %s203 = sand.u32 %s44, 1
        %s204 = smul.addr %s203, 36
        %s205 = scalar_lea.vmem [#allocation6], %s204
        // Predicated region
        $region29: #{tpu_custom_call.1} parent=27 // pred_check
          %p206 = pneg %p57
        $region30: #{tpu_custom_call.1} parent=27 // pred_check_branch
          %208 = sbr.rel (%p206) target = $region32
        $region31: #{tpu_custom_call.1} parent=27 // pred_region
          %210 = dma.done %s202, 576
        $region32: #{tpu_custom_call.1} parent=27 // pred_fallthru
          _
        %s211 = sand.u32 %s44, 1
        %s212 = scalar_lea.sflag [#allocation7], %s211
        %s213 = sand.u32 %s44, 1
        %s214 = smul.addr %s213, 36
        %s215 = scalar_lea.vmem [#allocation6], %s214
        %p216 = pneg %p57
        %p217 = pneg %p54
        %p218 = pneg %p78
        %p219 = pneg %p75
        %p220 = pneg %p106
        %p221 = pneg %p103
        %s222 = sand.u32 %s93, 1
        %s223 = scalar_lea.sflag [#allocation8], %s222
        %s224 = sand.u32 %s93, 1
        %s225 = smul.addr %s224, 8
        %s226 = scalar_lea.vmem [#allocation9], %s225
        %p227 = pneg %p127
        %p228 = pneg %p124
        %p229 = pneg %p148
        %p230 = pneg %p145
        %s231 = smul.u32 2, %s27
        %s232 = smul.u32 2, %s27
        %v234 = vld [vmem:[%s1] sm:$0xf]
        %v235 = vld [vmem:[%s205] sm:$0xf]
        %s236 = scalar_lea.vmem %s1, 4
        %v237 = vld [vmem:[%s236] sm:$0xf]
        %s238 = scalar_lea.vmem %s205, 4 [#allocation6]
        %v239 = vld [vmem:[%s238] sm:$0xf]
        %241 = vst [vmem:[#allocation1] ss:$4 sm:$0xff] %v239
        %v242 = vld.sshfl [vmem:[#allocation1] sm:$0xff pattern:$0x73625140]
        %v243 = vld.sshfl [vmem:[#allocation1 + $0x8] sm:$0xff pattern:$0x73625140]
        %vm244 = vcmask 31744
        %v246 = vsel %vm244, %v237, 0
        %vm248 = vcmask 1041408
        %v249 = vsel %vm248, %v242, 0
        %v251 = vsel %vm248, %v243, 0
        %253 = vmatpush.bf16.msra.mxu0 0
        %254 = vmatpush.bf16.msra.mxu0 0
        %255 = vmatpush.bf16.msra.mxu0 0
        %256 = vmatpush.bf16.msra.mxu0 0
        %257 = vmatpush.bf16.msra.mxu0 0
        %258 = vmatpush.bf16.msra.mxu0 0
        %259 = vmatpush.bf16.msra.mxu0 0
        %260 = vmatpush.bf16.msra.mxu0 %v249
        %261 = vmatmul.bf16.gmra.mxu0 %v246
        %v262 = vpop.f32.mrf.mxu0
        %v263 = vadd.f32 0.0, %v262
        %v264 = vpop.f32.mrf.mxu0
        %265 = vdwg.mxu0
        %266 = vmatpush.bf16.msra.mxu0 0
        %267 = vmatpush.bf16.msra.mxu0 0
        %268 = vmatpush.bf16.msra.mxu0 0
        %269 = vmatpush.bf16.msra.mxu0 0
        %270 = vmatpush.bf16.msra.mxu0 0
        %271 = vmatpush.bf16.msra.mxu0 0
        %272 = vmatpush.bf16.msra.mxu0 0
        %273 = vmatpush.bf16.msra.mxu0 %v251
        %274 = vmatmul.bf16.gmra.mxu0 %v246
        %v275 = vpop.f32.mrf.mxu0
        %v276 = vadd.f32 0.0, %v275
        %v277 = vpop.f32.mrf.mxu0
        %278 = vdwg.mxu0
        %280 = vst [vmem:[#allocation1] ss:$4 sm:$0xff] %v235
        %v281 = vld.sshfl [vmem:[#allocation1] sm:$0xff pattern:$0x73625140]
        %v282 = vld.sshfl [vmem:[#allocation1 + $0x8] sm:$0xff pattern:$0x73625140]
        %v284 = vsel %vm244, %v234, 0
        %v286 = vsel %vm248, %v281, 0
        %v288 = vsel %vm248, %v282, 0
        %290 = vmatpush.bf16.msra.mxu0 0
        %291 = vmatpush.bf16.msra.mxu0 0
        %292 = vmatpush.bf16.msra.mxu0 0
        %293 = vmatpush.bf16.msra.mxu0 0
        %294 = vmatpush.bf16.msra.mxu0 0
        %295 = vmatpush.bf16.msra.mxu0 0
        %296 = vmatpush.bf16.msra.mxu0 0
        %297 = vmatpush.bf16.msra.mxu0 %v286
        %298 = vmatmul.bf16.gmra.mxu0 %v284
        %v299 = vpop.f32.mrf.mxu0
        %v300 = vadd.f32 %v263, %v299
        %v301 = vpop.f32.mrf.mxu0
        %302 = vdwg.mxu0
        %303 = vmatpush.bf16.msra.mxu0 0
        %304 = vmatpush.bf16.msra.mxu0 0
        %305 = vmatpush.bf16.msra.mxu0 0
        %306 = vmatpush.bf16.msra.mxu0 0
        %307 = vmatpush.bf16.msra.mxu0 0
        %308 = vmatpush.bf16.msra.mxu0 0
        %309 = vmatpush.bf16.msra.mxu0 0
        %310 = vmatpush.bf16.msra.mxu0 %v288
        %311 = vmatmul.bf16.gmra.mxu0 %v284
        %v312 = vpop.f32.mrf.mxu0
        %v313 = vadd.f32 %v276, %v312
        %v314 = vpop.f32.mrf.mxu0
        %315 = vdwg.mxu0
        %s316 = scalar_lea.vmem %s1, 8
        %v317 = vld [vmem:[%s316] sm:$0xf]
        %s318 = scalar_lea.vmem %s205, 8 [#allocation6]
        %v319 = vld [vmem:[%s318] sm:$0xf]
        %321 = vst [vmem:[#allocation1] ss:$4 sm:$0xff] %v319
        %v322 = vld.sshfl [vmem:[#allocation1] sm:$0xff pattern:$0x73625140]
        %v323 = vld.sshfl [vmem:[#allocation1 + $0x8] sm:$0xff pattern:$0x73625140]
        %v325 = vsel %vm244, %v317, 0
        %v327 = vsel %vm248, %v322, 0
        %v329 = vsel %vm248, %v323, 0
        %331 = vmatpush.bf16.msra.mxu0 0
        %332 = vmatpush.bf16.msra.mxu0 0
        %333 = vmatpush.bf16.msra.mxu0 0
        %334 = vmatpush.bf16.msra.mxu0 0
        %335 = vmatpush.bf16.msra.mxu0 0
        %336 = vmatpush.bf16.msra.mxu0 0
        %337 = vmatpush.bf16.msra.mxu0 0
        %338 = vmatpush.bf16.msra.mxu0 %v327
        %339 = vmatmul.bf16.gmra.mxu0 %v325
        %v340 = vpop.f32.mrf.mxu0
        %v341 = vadd.f32 0.0, %v340
        %v342 = vpop.f32.mrf.mxu0
        %343 = vdwg.mxu0
        %344 = vmatpush.bf16.msra.mxu0 0
        %345 = vmatpush.bf16.msra.mxu0 0
        %346 = vmatpush.bf16.msra.mxu0 0
        %347 = vmatpush.bf16.msra.mxu0 0
        %348 = vmatpush.bf16.msra.mxu0 0
        %349 = vmatpush.bf16.msra.mxu0 0
        %350 = vmatpush.bf16.msra.mxu0 0
        %351 = vmatpush.bf16.msra.mxu0 %v329
        %352 = vmatmul.bf16.gmra.mxu0 %v325
        %v353 = vpop.f32.mrf.mxu0
        %v354 = vadd.f32 0.0, %v353
        %v355 = vpop.f32.mrf.mxu0
        %356 = vdwg.mxu0
        %v357 = vadd.f32 %v300, %v341
        %v358 = vadd.f32 %v313, %v354
        %s359 = scalar_lea.vmem %s1, 12
        %v360 = vld [vmem:[%s359] sm:$0xf]
        %s361 = scalar_lea.vmem %s205, 12 [#allocation6]
        %v362 = vld [vmem:[%s361] sm:$0xf]
        %364 = vst [vmem:[#allocation1] ss:$4 sm:$0xff] %v362
        %v365 = vld.sshfl [vmem:[#allocation1] sm:$0xff pattern:$0x73625140]
        %v366 = vld.sshfl [vmem:[#allocation1 + $0x8] sm:$0xff pattern:$0x73625140]
        %v368 = vsel %vm244, %v360, 0
        %v370 = vsel %vm248, %v365, 0
        %v372 = vsel %vm248, %v366, 0
        %374 = vmatpush.bf16.msra.mxu0 0
        %375 = vmatpush.bf16.msra.mxu0 0
        %376 = vmatpush.bf16.msra.mxu0 0
        %377 = vmatpush.bf16.msra.mxu0 0
        %378 = vmatpush.bf16.msra.mxu0 0
        %379 = vmatpush.bf16.msra.mxu0 0
        %380 = vmatpush.bf16.msra.mxu0 0
        %381 = vmatpush.bf16.msra.mxu0 %v370
        %382 = vmatmul.bf16.gmra.mxu0 %v368
        %v383 = vpop.f32.mrf.mxu0
        %v384 = vadd.f32 0.0, %v383
        %v385 = vpop.f32.mrf.mxu0
        %386 = vdwg.mxu0
        %387 = vmatpush.bf16.msra.mxu0 0
        %388 = vmatpush.bf16.msra.mxu0 0
        %389 = vmatpush.bf16.msra.mxu0 0
        %390 = vmatpush.bf16.msra.mxu0 0
        %391 = vmatpush.bf16.msra.mxu0 0
        %392 = vmatpush.bf16.msra.mxu0 0
        %393 = vmatpush.bf16.msra.mxu0 0
        %394 = vmatpush.bf16.msra.mxu0 %v372
        %395 = vmatmul.bf16.gmra.mxu0 %v368
        %v396 = vpop.f32.mrf.mxu0
        %v397 = vadd.f32 0.0, %v396
        %v398 = vpop.f32.mrf.mxu0
        %399 = vdwg.mxu0
        %v400 = vadd.f32 %v357, %v384
        %v401 = vadd.f32 %v358, %v397
        %s402 = scalar_lea.vmem %s1, 16
        %v403 = vld [vmem:[%s402] sm:$0xf]
        %s404 = scalar_lea.vmem %s205, 16 [#allocation6]
        %v405 = vld [vmem:[%s404] sm:$0xf]
        %407 = vst [vmem:[#allocation1] ss:$4 sm:$0xff] %v405
        %v408 = vld.sshfl [vmem:[#allocation1] sm:$0xff pattern:$0x73625140]
        %v409 = vld.sshfl [vmem:[#allocation1 + $0x8] sm:$0xff pattern:$0x73625140]
        %v411 = vsel %vm244, %v403, 0
        %v413 = vsel %vm248, %v408, 0
        %v415 = vsel %vm248, %v409, 0
        %417 = vmatpush.bf16.msra.mxu0 0
        %418 = vmatpush.bf16.msra.mxu0 0
        %419 = vmatpush.bf16.msra.mxu0 0
        %420 = vmatpush.bf16.msra.mxu0 0
        %421 = vmatpush.bf16.msra.mxu0 0
        %422 = vmatpush.bf16.msra.mxu0 0
        %423 = vmatpush.bf16.msra.mxu0 0
        %424 = vmatpush.bf16.msra.mxu0 %v413
        %425 = vmatmul.bf16.gmra.mxu0 %v411
        %v426 = vpop.f32.mrf.mxu0
        %v427 = vadd.f32 0.0, %v426
        %v428 = vpop.f32.mrf.mxu0
        %429 = vdwg.mxu0
        %430 = vmatpush.bf16.msra.mxu0 0
        %431 = vmatpush.bf16.msra.mxu0 0
        %432 = vmatpush.bf16.msra.mxu0 0
        %433 = vmatpush.bf16.msra.mxu0 0
        %434 = vmatpush.bf16.msra.mxu0 0
        %435 = vmatpush.bf16.msra.mxu0 0
        %436 = vmatpush.bf16.msra.mxu0 0
        %437 = vmatpush.bf16.msra.mxu0 %v415
        %438 = vmatmul.bf16.gmra.mxu0 %v411
        %v439 = vpop.f32.mrf.mxu0
        %v440 = vadd.f32 0.0, %v439
        %v441 = vpop.f32.mrf.mxu0
        %442 = vdwg.mxu0
        %v443 = vadd.f32 %v400, %v427
        %v444 = vadd.f32 %v401, %v440
        %s445 = scalar_lea.vmem %s1, 20
        %v446 = vld [vmem:[%s445] sm:$0xf]
        %s447 = scalar_lea.vmem %s205, 20 [#allocation6]
        %v448 = vld [vmem:[%s447] sm:$0xf]
        %450 = vst [vmem:[#allocation1] ss:$4 sm:$0xff] %v448
        %v451 = vld.sshfl [vmem:[#allocation1] sm:$0xff pattern:$0x73625140]
        %v452 = vld.sshfl [vmem:[#allocation1 + $0x8] sm:$0xff pattern:$0x73625140]
        %v454 = vsel %vm244, %v446, 0
        %v456 = vsel %vm248, %v451, 0
        %v458 = vsel %vm248, %v452, 0
        %460 = vmatpush.bf16.msra.mxu0 0
        %461 = vmatpush.bf16.msra.mxu0 0
        %462 = vmatpush.bf16.msra.mxu0 0
        %463 = vmatpush.bf16.msra.mxu0 0
        %464 = vmatpush.bf16.msra.mxu0 0
        %465 = vmatpush.bf16.msra.mxu0 0
        %466 = vmatpush.bf16.msra.mxu0 0
        %467 = vmatpush.bf16.msra.mxu0 %v456
        %468 = vmatmul.bf16.gmra.mxu0 %v454
        %v469 = vpop.f32.mrf.mxu0
        %v470 = vadd.f32 0.0, %v469
        %v471 = vpop.f32.mrf.mxu0
        %472 = vdwg.mxu0
        %473 = vmatpush.bf16.msra.mxu0 0
        %474 = vmatpush.bf16.msra.mxu0 0
        %475 = vmatpush.bf16.msra.mxu0 0
        %476 = vmatpush.bf16.msra.mxu0 0
        %477 = vmatpush.bf16.msra.mxu0 0
        %478 = vmatpush.bf16.msra.mxu0 0
        %479 = vmatpush.bf16.msra.mxu0 0
        %480 = vmatpush.bf16.msra.mxu0 %v458
        %481 = vmatmul.bf16.gmra.mxu0 %v454
        %v482 = vpop.f32.mrf.mxu0
        %v483 = vadd.f32 0.0, %v482
        %v484 = vpop.f32.mrf.mxu0
        %485 = vdwg.mxu0
        %v486 = vadd.f32 %v443, %v470
        %v487 = vadd.f32 %v444, %v483
        %s488 = scalar_lea.vmem %s1, 24
        %v489 = vld [vmem:[%s488] sm:$0xf]
        %s490 = scalar_lea.vmem %s205, 24 [#allocation6]
        %v491 = vld [vmem:[%s490] sm:$0xf]
        %493 = vst [vmem:[#allocation1] ss:$4 sm:$0xff] %v491
        %v494 = vld.sshfl [vmem:[#allocation1] sm:$0xff pattern:$0x73625140]
        %v495 = vld.sshfl [vmem:[#allocation1 + $0x8] sm:$0xff pattern:$0x73625140]
        %v497 = vsel %vm244, %v489, 0
        %v499 = vsel %vm248, %v494, 0
        %v501 = vsel %vm248, %v495, 0
        %503 = vmatpush.bf16.msra.mxu0 0
        %504 = vmatpush.bf16.msra.mxu0 0
        %505 = vmatpush.bf16.msra.mxu0 0
        %506 = vmatpush.bf16.msra.mxu0 0
        %507 = vmatpush.bf16.msra.mxu0 0
        %508 = vmatpush.bf16.msra.mxu0 0
        %509 = vmatpush.bf16.msra.mxu0 0
        %510 = vmatpush.bf16.msra.mxu0 %v499
        %511 = vmatmul.bf16.gmra.mxu0 %v497
        %v512 = vpop.f32.mrf.mxu0
        %v513 = vadd.f32 0.0, %v512
        %v514 = vpop.f32.mrf.mxu0
        %515 = vdwg.mxu0
        %516 = vmatpush.bf16.msra.mxu0 0
        %517 = vmatpush.bf16.msra.mxu0 0
        %518 = vmatpush.bf16.msra.mxu0 0
        %519 = vmatpush.bf16.msra.mxu0 0
        %520 = vmatpush.bf16.msra.mxu0 0
        %521 = vmatpush.bf16.msra.mxu0 0
        %522 = vmatpush.bf16.msra.mxu0 0
        %523 = vmatpush.bf16.msra.mxu0 %v501
        %524 = vmatmul.bf16.gmra.mxu0 %v497
        %v525 = vpop.f32.mrf.mxu0
        %v526 = vadd.f32 0.0, %v525
        %v527 = vpop.f32.mrf.mxu0
        %528 = vdwg.mxu0
        %v529 = vadd.f32 %v486, %v513
        %v530 = vadd.f32 %v487, %v526
        %s531 = scalar_lea.vmem %s1, 28
        %v532 = vld [vmem:[%s531] sm:$0xf]
        %s533 = scalar_lea.vmem %s205, 28 [#allocation6]
        %v534 = vld [vmem:[%s533] sm:$0xf]
        %536 = vst [vmem:[#allocation1] ss:$4 sm:$0xff] %v534
        %v537 = vld.sshfl [vmem:[#allocation1] sm:$0xff pattern:$0x73625140]
        %v538 = vld.sshfl [vmem:[#allocation1 + $0x8] sm:$0xff pattern:$0x73625140]
        %v540 = vsel %vm244, %v532, 0
        %v542 = vsel %vm248, %v537, 0
        %v544 = vsel %vm248, %v538, 0
        %546 = vmatpush.bf16.msra.mxu0 0
        %547 = vmatpush.bf16.msra.mxu0 0
        %548 = vmatpush.bf16.msra.mxu0 0
        %549 = vmatpush.bf16.msra.mxu0 0
        %550 = vmatpush.bf16.msra.mxu0 0
        %551 = vmatpush.bf16.msra.mxu0 0
        %552 = vmatpush.bf16.msra.mxu0 0
        %553 = vmatpush.bf16.msra.mxu0 %v542
        %554 = vmatmul.bf16.gmra.mxu0 %v540
        %v555 = vpop.f32.mrf.mxu0
        %v556 = vadd.f32 0.0, %v555
        %v557 = vpop.f32.mrf.mxu0
        %558 = vdwg.mxu0
        %559 = vmatpush.bf16.msra.mxu0 0
        %560 = vmatpush.bf16.msra.mxu0 0
        %561 = vmatpush.bf16.msra.mxu0 0
        %562 = vmatpush.bf16.msra.mxu0 0
        %563 = vmatpush.bf16.msra.mxu0 0
        %564 = vmatpush.bf16.msra.mxu0 0
        %565 = vmatpush.bf16.msra.mxu0 0
        %566 = vmatpush.bf16.msra.mxu0 %v544
        %567 = vmatmul.bf16.gmra.mxu0 %v540
        %v568 = vpop.f32.mrf.mxu0
        %v569 = vadd.f32 0.0, %v568
        %v570 = vpop.f32.mrf.mxu0
        %571 = vdwg.mxu0
        %v572 = vadd.f32 %v529, %v556
        %v573 = vadd.f32 %v530, %v569
        %s574 = scalar_lea.vmem %s1, 32
        %v575 = vld [vmem:[%s574] sm:$0xf]
        %s576 = scalar_lea.vmem %s205, 32 [#allocation6]
        %v577 = vld [vmem:[%s576] sm:$0xf]
        %579 = vst [vmem:[#allocation1] ss:$4 sm:$0xff] %v577
        %v580 = vld.sshfl [vmem:[#allocation1] sm:$0xff pattern:$0x73625140]
        %v581 = vld.sshfl [vmem:[#allocation1 + $0x8] sm:$0xff pattern:$0x73625140]
        %v583 = vsel %vm244, %v575, 0
        %v585 = vsel %vm248, %v580, 0
        %v587 = vsel %vm248, %v581, 0
        %589 = vmatpush.bf16.msra.mxu0 0
        %590 = vmatpush.bf16.msra.mxu0 0
        %591 = vmatpush.bf16.msra.mxu0 0
        %592 = vmatpush.bf16.msra.mxu0 0
        %593 = vmatpush.bf16.msra.mxu0 0
        %594 = vmatpush.bf16.msra.mxu0 0
        %595 = vmatpush.bf16.msra.mxu0 0
        %596 = vmatpush.bf16.msra.mxu0 %v585
        %597 = vmatmul.bf16.gmra.mxu0 %v583
        %v598 = vpop.f32.mrf.mxu0
        %v599 = vadd.f32 0.0, %v598
        %v600 = vpop.f32.mrf.mxu0
        %601 = vdwg.mxu0
        %602 = vmatpush.bf16.msra.mxu0 0
        %603 = vmatpush.bf16.msra.mxu0 0
        %604 = vmatpush.bf16.msra.mxu0 0
        %605 = vmatpush.bf16.msra.mxu0 0
        %606 = vmatpush.bf16.msra.mxu0 0
        %607 = vmatpush.bf16.msra.mxu0 0
        %608 = vmatpush.bf16.msra.mxu0 0
        %609 = vmatpush.bf16.msra.mxu0 %v587
        %610 = vmatmul.bf16.gmra.mxu0 %v583
        %v611 = vpop.f32.mrf.mxu0
        %v612 = vadd.f32 0.0, %v611
        %v613 = vpop.f32.mrf.mxu0
        %614 = vdwg.mxu0
        %v615 = vadd.f32 %v572, %v599
        %v616 = vadd.f32 %v573, %v612
        %v617 = vpack.c.bf16 %v616, %v615
        %618 = vst [vmem:[%s226] sm:$0xff] %v617
        %v619 = vadd.f32 %v615, %v616
        %620 = vadd.xlane.f32.xlu0 %v619
        %v621 = vpop.xlane.xlu0 %620
        %v622 = vmul.f32 %v621, 0.00390625
        %v623 = vsub.f32 %v615, %v622
        %v624 = vsub.f32 %v616, %v622
        %vm625 = vcmask 7168
        %626 = vst.msk [vmem:[#allocation4] sm:$0xff] %vm625, %v622
        %v627 = vmul.f32 %v623, %v623
        %v628 = vmul.f32 %v624, %v624
        %v629 = vadd.f32 %v627, %v628
        %630 = vadd.xlane.f32.xlu0 %v629
        %v631 = vpop.xlane.xlu0 %630
        %632 = vst.msk [vmem:[#allocation5] sm:$0xff] %vm625, %v631
        %s633 = sadd.s32 %s26, %s27
        %p634 = scmp.eq.s32.totalorder %s633, 0
        // Predicated region
        $region33: #{tpu_custom_call.1} parent=27 // pred_check
          %p635 = pneg %p634
        $region34: #{tpu_custom_call.1} parent=27 // pred_check_branch
          %637 = sbr.rel (%p635) target = $region36
        $region35: #{tpu_custom_call.1} parent=27 // pred_region
          %v638 = vld [vmem:[#allocation4] sm:$0xff]
          %639 = vst.msk [vmem:[#allocation2] sm:$0xff] %vm625, %v638
          %v640 = vld [vmem:[#allocation5] sm:$0xff]
          %641 = vst.msk [vmem:[#allocation3] sm:$0xff] %vm625, %v640
        $region36: #{tpu_custom_call.1} parent=27 // pred_fallthru
          _
        %p642 = scmp.gt.s32.totalorder %s633, 0
        // Predicated region
        $region37: #{tpu_custom_call.1} parent=27 // pred_check
          %p643 = pneg %p642
        $region38: #{tpu_custom_call.1} parent=27 // pred_check_branch
          %645 = sbr.rel (%p643) target = $region40
        $region39: #{tpu_custom_call.1} parent=27 // pred_region
          %s646 = scvt.s32.f32 %s26
          %s647 = smul.f32 %s646, 256.0
          %s648 = scvt.s32.f32 %s27
          %s649 = smul.f32 %s648, 256.0
          %s650 = sadd.f32 %s647, %s649
          %s651 = sadd.f32 %s650, 256.0
          %v652 = vld [vmem:[#allocation4] sm:$0xff]
          %v653 = vld [vmem:[#allocation2] sm:$0xff]
          %v654 = vsub.f32 %v652, %v653
          %v655 = vstv %s651
          %v656 = vrcp.pop %v655
          %v657 = vmul.f32 %v655, %v656
          %v658 = vsub.f32 1.0, %v657
          %v659 = vmul.f32 %v656, %v658
          %v660 = vadd.f32 %v656, %v659
          %vm661 = vweird.f32 %v655
          %vm662 = vweird.f32 %v656
          %vm663 = vmor %vm661, %vm662
          %v664 = vsel %vm663, %v656, %v660
          %v665 = vand.u32 2147483647, %v655
          %vm666 = vcmp.eq.f32.partialorder %v665, 8.507059e+37
          %v667 = vand.u32 %v655, 2147483648
          %v668 = vor.u32 1.1754944e-38, %v667
          %v669 = vsel %vm666, %v668, %v664
          %s670 = vtos %v669
          %s671 = smul.f32 256.0, %s670
          %v672 = vstv %s671
          %v673 = vmul.f32 %v654, %v672
          %v674 = vadd.f32 %v653, %v673
          %675 = vst.msk [vmem:[#allocation2] sm:$0xff] %vm625, %v674
          %v676 = vld [vmem:[#allocation3] sm:$0xff]
          %v677 = vld [vmem:[#allocation5] sm:$0xff]
          %v678 = vadd.f32 %v676, %v677
          %v679 = vmul.f32 %v654, %v654
          %s680 = smul.f32 %s650, 256.0
          %v681 = vstv %s651
          %v682 = vrcp.pop %v681
          %v683 = vmul.f32 %v681, %v682
          %v684 = vsub.f32 1.0, %v683
          %v685 = vmul.f32 %v682, %v684
          %v686 = vadd.f32 %v682, %v685
          %vm687 = vweird.f32 %v681
          %vm688 = vweird.f32 %v682
          %vm689 = vmor %vm687, %vm688
          %v690 = vsel %vm689, %v682, %v686
          %v691 = vand.u32 2147483647, %v681
          %vm692 = vcmp.eq.f32.partialorder %v691, 8.507059e+37
          %v693 = vand.u32 %v681, 2147483648
          %v694 = vor.u32 1.1754944e-38, %v693
          %v695 = vsel %vm692, %v694, %v690
          %s696 = vtos %v695
          %s697 = smul.f32 %s680, %s696
          %v698 = vstv %s697
          %v699 = vmul.f32 %v679, %v698
          %v700 = vadd.f32 %v678, %v699
          %701 = vst.msk [vmem:[#allocation3] sm:$0xff] %vm625, %v700
        $region40: #{tpu_custom_call.1} parent=27 // pred_fallthru
          _
        %p702 = scmp.eq.s32.totalorder %s633, 1
        // Predicated region
        $region41: #{tpu_custom_call.1} parent=27 // pred_check
          %p703 = pneg %p702
        $region42: #{tpu_custom_call.1} parent=27 // pred_check_branch
          %705 = sbr.rel (%p703) target = $region44
        $region43: #{tpu_custom_call.1} parent=27 // pred_region
          %v706 = vld [vmem:[#allocation2] sm:$0xff]
          %707 = vst.msk [vmem:[%s3] sm:$0xff] %vm625, %v706
          %v708 = vld [vmem:[#allocation3] sm:$0xff]
          %v709 = vmul.f32 %v708, 0.001953125
          %v710 = vadd.f32 %v709, 1e-05
          %v711 = vrsqrt.pop %v710
          %v712 = vmul.f32 %v711, %v710
          %v713 = vmul.f32 %v712, %v711
          %v714 = vmul.f32 0.5, %v713
          %v715 = vsub.f32 1.5, %v714
          %v716 = vmul.f32 %v711, %v715
          %vm717 = vweird.f32 %v710
          %vm718 = vweird.f32 %v711
          %vm719 = vmor %vm717, %vm718
          %v720 = vsel %vm719, %v711, %v716
          %721 = vst.msk [vmem:[%s4] sm:$0xff] %vm625, %v720
        $region44: #{tpu_custom_call.1} parent=27 // pred_fallthru
          _
        %s722 = sand.u32 %s93, 1
        %s723 = scalar_lea.sflag [#allocation8], %s722
        %s724 = sand.u32 %s93, 1
        %s725 = smul.addr %s724, 8
        %s726 = scalar_lea.vmem [#allocation9], %s725
        // Predicated region
        $region45: #{tpu_custom_call.1} parent=27 // pred_check
          %p727 = pneg %p103
        $region46: #{tpu_custom_call.1} parent=27 // pred_check_branch
          %729 = sbr.rel (%p727) target = $region48
        $region47: #{tpu_custom_call.1} parent=27 // pred_region
          %s730 = smul.u32 2, %s27
          %732 = vsyncadd %s723, 0
          %s733 = smul.addr %s26, 2
          %s734 = sadd.s32 %s730, %s733
          %s735 = smul.addr %s734, 4
          %s736 = scalar_lea.hbm %s2, %s735
          %s738 = sshll.u32 %s726, 4
          %s739 = int_to_ptr.vmem [resolvable:$true] %s738
          %s740 = sshll.u32 %s736, 4
          %s741 = int_to_ptr.hbm [resolvable:$true] %s740
          %743 = dma.vmem_to_hbm [thread:$0]  %s739, 128, %s741, %s723
        $region48: #{tpu_custom_call.1} parent=27 // pred_fallthru
          _
        // Predicated region
        $region49: #{tpu_custom_call.1} parent=27 // pred_check
          %p744 = pneg %p124
        $region50: #{tpu_custom_call.1} parent=27 // pred_check_branch
          %746 = sbr.rel (%p744) target = $region52
        $region51: #{tpu_custom_call.1} parent=27 // pred_region
          _
        $region52: #{tpu_custom_call.1} parent=27 // pred_fallthru
          _
        // Predicated region
        $region53: #{tpu_custom_call.1} parent=27 // pred_check
          %p747 = pneg %p145
        $region54: #{tpu_custom_call.1} parent=27 // pred_check_branch
          %749 = sbr.rel (%p747) target = $region56
        $region55: #{tpu_custom_call.1} parent=27 // pred_region
          _
        $region56: #{tpu_custom_call.1} parent=27 // pred_fallthru
          _
        // Predicated region
        $region57: #{tpu_custom_call.1} parent=27 // pred_check
          %p750 = pneg %p124
        $region58: #{tpu_custom_call.1} parent=27 // pred_check_branch
          %752 = sbr.rel (%p750) target = $region60
        $region59: #{tpu_custom_call.1} parent=27 // pred_region
          _
        $region60: #{tpu_custom_call.1} parent=27 // pred_fallthru
          _
        // Predicated region
        $region61: #{tpu_custom_call.1} parent=27 // pred_check
          %p753 = pneg %p145
        $region62: #{tpu_custom_call.1} parent=27 // pred_check_branch
          %755 = sbr.rel (%p753) target = $region64
        $region63: #{tpu_custom_call.1} parent=27 // pred_region
          _
        $region64: #{tpu_custom_call.1} parent=27 // pred_fallthru
          _
      $region28: #{tpu_custom_call.1} parent=5 // pred_fallthru
        _
      %p756 = scmp.le.s32.totalorder 2, %s17
      // Predicated region
      $region65: #{tpu_custom_call.1} parent=5 // pred_check
        %p757 = pneg %p756
      $region66: #{tpu_custom_call.1} parent=5 // pred_check_branch
        %759 = sbr.rel (%p757) target = $region68
      $region67: #{tpu_custom_call.1} parent=5 // pred_region
        %s760 = ssub.s32 %s17, 2
        // Predicated region
        $region69: #{tpu_custom_call.1} parent=67 // pred_check
          %p761 = pneg %p109
        $region70: #{tpu_custom_call.1} parent=67 // pred_check_branch
          %763 = sbr.rel (%p761) target = $region72
        $region71: #{tpu_custom_call.1} parent=67 // pred_region
          %s764 = sand.u32 %s94, 1
          %s765 = scalar_lea.sflag [#allocation8], %s764
          %s766 = sand.u32 %s94, 1
          %s767 = smul.addr %s766, 8
          %s768 = scalar_lea.vmem [#allocation9], %s767
          %770 = dma.done %s765, 128
        $region72: #{tpu_custom_call.1} parent=67 // pred_fallthru
          _
      $region68: #{tpu_custom_call.1} parent=5 // pred_fallthru
        _
    $region6: #{tpu_custom_call.1} parent=1 // loop_footer
      %s21 = sadd.s32 1, %s17
    $region7: #{tpu_custom_call.1} parent=1 // loop_footer_branch
      %16 = sbr.rel target = $region3
    $region8: #{tpu_custom_call.1} parent=1 // loop_exit
      _
    %771 = vsyncpa [#allocation7], 1
    %s772 = scalar_lea.sflag [#allocation7], 1
    %773 = vsyncpa %s772, 1
    %774 = vsyncpa [#allocation8], 1
    %s775 = scalar_lea.sflag [#allocation8], 1
    %776 = vsyncpa %s775, 1

</llo_original>
